<compile_context>
chip_gen: v5e
topology: v5e:2x2
jax: 0.10.0
libtpu: 0.0.40
codegen_flags: <defaults>
</compile_context>

<pallas_src>
import functools

import jax
import jax.numpy as jnp
from jax import lax
from jax.experimental import pallas as pl
from jax.experimental.pallas import tpu as pltpu

EPS = 1e-5


def _downsample_kernel(x_ref, w_ref, g_ref, b_ref, o_ref, sum_ref, sq_ref,
                       *, K, L_out, Cout, n_rows):
    phase = pl.program_id(0)   # 0 = accumulate batch stats, 1 = normalize + write
    batch = pl.program_id(1)

    # ---- Conv1d (stride 2, pad (K-1)//2) as K small MXU matmuls over even/odd planes ----
    xe = x_ref[0, 0]           # (Cin, P) bf16 : padded input at even positions
    xo = x_ref[0, 1]           # (Cin, P) bf16 : padded input at odd positions
    y = jnp.zeros((Cout, L_out), jnp.float32)
    for k in range(K):
        plane = xe if (k % 2 == 0) else xo
        tap = plane[:, k // 2: k // 2 + L_out]                     # (Cin, L_out), = x_pad[:, 2l+k]
        y = y + jnp.dot(w_ref[k], tap, preferred_element_type=jnp.float32)  # (Cout, L_out) f32

    # ---- phase 0: accumulate global per-channel batch statistics ----
    @pl.when(jnp.logical_and(phase == 0, batch == 0))
    def _init():
        sum_ref[...] = jnp.zeros_like(sum_ref)
        sq_ref[...] = jnp.zeros_like(sq_ref)

    @pl.when(phase == 0)
    def _stats():
        sum_ref[...] += jnp.sum(y, axis=1, keepdims=True)          # (Cout, 1)
        sq_ref[...] += jnp.sum(y * y, axis=1, keepdims=True)       # (Cout, 1)

    # ---- phase 1: train-mode BN (biased var) + affine + ReLU, lane-dense store ----
    @pl.when(phase == 1)
    def _write():
        inv_n = jnp.float32(1.0 / n_rows)
        mean = sum_ref[...] * inv_n                                # (Cout, 1)
        var = sq_ref[...] * inv_n - mean * mean                    # biased variance
        scale = g_ref[...] * lax.rsqrt(var + EPS)
        shift = b_ref[...] - mean * scale
        z = y * scale + shift
        # Dropout(p=0) is Identity -> nothing to do.
        o_ref[0] = jnp.maximum(z, 0.0).astype(o_ref.dtype)


def downsample_forward(x, weight, gamma, beta, *, ksize=3, stride=2):
    """x: (N, Cin, L); weight: (Cout, Cin, K); gamma/beta: (Cout,). Returns (N, Cout, L_out)."""
    N, Cin, L = x.shape
    Cout, _, K = weight.shape
    assert K == ksize
    assert stride == 2, "kernel specializes the module default stride=2"
    pad = (K - 1) // 2
    L_out = (L + 2 * pad - K) // stride + 1

    # --- glue: pad + even/odd deinterleave (single cheap pass, no K-fold im2col) ---
    P = L_out + (K - 1) // 2                  # half-plane length
    pad_r = 2 * P - pad - L                   # >= pad; extra zeros are never read
    x_pad = jnp.pad(x.astype(jnp.bfloat16), ((0, 0), (0, 0), (pad, pad_r)))
    # (N, 2, Cin, P): plane 0 = even padded positions, plane 1 = odd padded positions
    x_eo = x_pad.reshape(N, Cin, P, 2).transpose(0, 3, 1, 2)

    w_taps = weight.astype(jnp.bfloat16).transpose(2, 0, 1)        # (K, Cout, Cin)
    gamma2 = gamma.astype(jnp.float32).reshape(Cout, 1)
    beta2 = beta.astype(jnp.float32).reshape(Cout, 1)

    kernel = functools.partial(_downsample_kernel, K=K, L_out=L_out, Cout=Cout,
                               n_rows=N * L_out)

    grid_spec = pltpu.PrefetchScalarGridSpec(
        num_scalar_prefetch=0,
        grid=(2, N),                          # (phase, batch tile)
        in_specs=[
            pl.BlockSpec((1, 2, Cin, P), lambda p, n: (n, 0, 0, 0)),
            pl.BlockSpec((K, Cout, Cin), lambda p, n: (0, 0, 0)),   # weights resident
            pl.BlockSpec((Cout, 1), lambda p, n: (0, 0)),           # gamma loaded once
            pl.BlockSpec((Cout, 1), lambda p, n: (0, 0)),           # beta loaded once
        ],
        # phase 0 never writes; keep the output block index pinned at 0 during phase 0 so
        # no garbage writeback happens, phase 1 walks the real blocks.
        out_specs=pl.BlockSpec((1, Cout, L_out), lambda p, n: (p * n, 0, 0)),
        scratch_shapes=[
            pltpu.VMEM((Cout, 1), jnp.float32),   # per-channel sum
            pltpu.VMEM((Cout, 1), jnp.float32),   # per-channel sum of squares
        ],
    )

    return pl.pallas_call(
        kernel,
        out_shape=jax.ShapeDtypeStruct((N, Cout, L_out), x.dtype),
        grid_spec=grid_spec,
        compiler_params=pltpu.CompilerParams(
            dimension_semantics=("arbitrary", "arbitrary")),
    )(x_eo, w_taps, gamma2, beta2)


if __name__ == "__main__":
    key = jax.random.PRNGKey(0)
    N, Cin, Cout, L, K, stride = 2, 4, 8, 16, 3, 2

    kx, kw, kg, kb = jax.random.split(key, 4)
    x = jax.random.normal(kx, (N, Cin, L), dtype=jnp.float32)
    # Conv1d(cin, cout, ksize, bias=False since norm='batch'): weight shape (Cout, Cin, K)
    fan_in = Cin * K
    bound = 1.0 / (fan_in ** 0.5)
    weight = jax.random.uniform(kw, (Cout, Cin, K), minval=-bound, maxval=bound,
                                dtype=jnp.float32)
    gamma = 1.0 + 0.1 * jax.random.normal(kg, (Cout,), dtype=jnp.float32)
    beta = 0.1 * jax.random.normal(kb, (Cout,), dtype=jnp.float32)

    out = downsample_forward(x, weight, gamma, beta, ksize=K, stride=stride)
    jax.block_until_ready(out)
    assert out.shape == (N, Cout, L // stride), out.shape

    # plain-JAX reference of the same forward pass (conv -> train-mode BN -> ReLU)
    y_ref = lax.conv_general_dilated(
        x, weight, window_strides=(stride,), padding=[(1, 1)],
        dimension_numbers=("NCH", "OIH", "NCH"))
    m = y_ref.mean(axis=(0, 2), keepdims=True)
    v = ((y_ref - m) ** 2).mean(axis=(0, 2), keepdims=True)
    ref = jnp.maximum((y_ref - m) * lax.rsqrt(v + EPS) * gamma[None, :, None]
                      + beta[None, :, None], 0.0)
    max_err = float(jnp.max(jnp.abs(out - ref)))
    assert max_err < 5e-2, max_err   # bf16 matmul inputs, f32 accumulation

    print("KERNEL_OK")
</pallas_src>

<mosaic_0001>
module attributes {stable_mosaic.version = 11 : i64} {
  func.func @_downsample_kernel(%arg0: i32, %arg1: i32, %arg2: memref<1x2x4x9xbf16, #tpu.memory_space<vmem>>, %arg3: memref<3x8x4xbf16, #tpu.memory_space<vmem>>, %arg4: memref<8x1xf32, #tpu.memory_space<vmem>>, %arg5: memref<8x1xf32, #tpu.memory_space<vmem>>, %arg6: memref<1x8x8xf32, #tpu.memory_space<vmem>>, %arg7: memref<8x1xf32, #tpu.memory_space<vmem>>, %arg8: memref<8x1xf32, #tpu.memory_space<vmem>>) attributes {dimension_semantics = [#tpu.dimension_semantics<arbitrary>, #tpu.dimension_semantics<arbitrary>], iteration_bounds = array<i64: 2, 2>, scalar_prefetch = 0 : i64, scratch_operands = 2 : i64, tpu.core_type = #tpu.core_type<tc>, window_params = [{transform_indices = @transform_0, window_bounds = array<i64: 1, 2, 4, 9>}, {pipeline_mode = #tpu.pipeline_mode<synchronous>, transform_indices = @transform_1, window_bounds = array<i64: 3, 8, 4>}, {pipeline_mode = #tpu.pipeline_mode<synchronous>, transform_indices = @transform_2, window_bounds = array<i64: 8, 1>}, {pipeline_mode = #tpu.pipeline_mode<synchronous>, transform_indices = @transform_3, window_bounds = array<i64: 8, 1>}, {transform_indices = @transform_4, window_bounds = array<i64: 1, 8, 8>}]} {
    %c0 = arith.constant 0 : index
    %c0_0 = arith.constant 0 : index
    %c0_1 = arith.constant 0 : index
    %c0_2 = arith.constant 0 : index
    %0 = vector.load %arg2[%c0, %c0_0, %c0_1, %c0_2] : memref<1x2x4x9xbf16, #tpu.memory_space<vmem>>, vector<1x1x4x9xbf16>
    %1 = vector.shape_cast %0 : vector<1x1x4x9xbf16> to vector<4x9xbf16>
    %c0_3 = arith.constant 0 : index
    %c1 = arith.constant 1 : index
    %c0_4 = arith.constant 0 : index
    %c0_5 = arith.constant 0 : index
    %2 = vector.load %arg2[%c0_3, %c1, %c0_4, %c0_5] : memref<1x2x4x9xbf16, #tpu.memory_space<vmem>>, vector<1x1x4x9xbf16>
    %3 = vector.shape_cast %2 : vector<1x1x4x9xbf16> to vector<4x9xbf16>
    %cst = arith.constant 0.000000e+00 : f32
    %4 = vector.broadcast %cst : f32 to vector<8x8xf32>
    %5 = vector.extract_strided_slice %1 {offsets = [0, 0], sizes = [4, 8], strides = [1, 1]} : vector<4x9xbf16> to vector<4x8xbf16>
    %c0_6 = arith.constant 0 : index
    %c0_7 = arith.constant 0 : index
    %c0_8 = arith.constant 0 : index
    %6 = vector.load %arg3[%c0_6, %c0_7, %c0_8] : memref<3x8x4xbf16, #tpu.memory_space<vmem>>, vector<1x8x4xbf16>
    %7 = vector.shape_cast %6 : vector<1x8x4xbf16> to vector<8x4xbf16>
    %cst_9 = arith.constant dense<0.000000e+00> : vector<8x8xf32>
    %8 = tpu.matmul %7, %5, %cst_9 {dimension_numbers = #tpu.dot_dimension_numbers<[1], [0], [0], [1], [0, 0, 1, 1], [], []>} : vector<8x4xbf16>, vector<4x8xbf16>, vector<8x8xf32> -> vector<8x8xf32>
    %9 = arith.addf %4, %8 : vector<8x8xf32>
    %10 = vector.extract_strided_slice %3 {offsets = [0, 0], sizes = [4, 8], strides = [1, 1]} : vector<4x9xbf16> to vector<4x8xbf16>
    %c1_10 = arith.constant 1 : index
    %c0_11 = arith.constant 0 : index
    %c0_12 = arith.constant 0 : index
    %11 = vector.load %arg3[%c1_10, %c0_11, %c0_12] : memref<3x8x4xbf16, #tpu.memory_space<vmem>>, vector<1x8x4xbf16>
    %12 = vector.shape_cast %11 : vector<1x8x4xbf16> to vector<8x4xbf16>
    %cst_13 = arith.constant dense<0.000000e+00> : vector<8x8xf32>
    %13 = tpu.matmul %12, %10, %cst_13 {dimension_numbers = #tpu.dot_dimension_numbers<[1], [0], [0], [1], [0, 0, 1, 1], [], []>} : vector<8x4xbf16>, vector<4x8xbf16>, vector<8x8xf32> -> vector<8x8xf32>
    %14 = arith.addf %9, %13 : vector<8x8xf32>
    %15 = vector.extract_strided_slice %1 {offsets = [0, 1], sizes = [4, 8], strides = [1, 1]} : vector<4x9xbf16> to vector<4x8xbf16>
    %c2 = arith.constant 2 : index
    %c0_14 = arith.constant 0 : index
    %c0_15 = arith.constant 0 : index
    %16 = vector.load %arg3[%c2, %c0_14, %c0_15] : memref<3x8x4xbf16, #tpu.memory_space<vmem>>, vector<1x8x4xbf16>
    %17 = vector.shape_cast %16 : vector<1x8x4xbf16> to vector<8x4xbf16>
    %cst_16 = arith.constant dense<0.000000e+00> : vector<8x8xf32>
    %18 = tpu.matmul %17, %15, %cst_16 {dimension_numbers = #tpu.dot_dimension_numbers<[1], [0], [0], [1], [0, 0, 1, 1], [], []>} : vector<8x4xbf16>, vector<4x8xbf16>, vector<8x8xf32> -> vector<8x8xf32>
    %19 = arith.addf %14, %18 : vector<8x8xf32>
    %c0_i32 = arith.constant 0 : i32
    %20 = arith.cmpi eq, %arg0, %c0_i32 : i32
    %c0_i32_17 = arith.constant 0 : i32
    %21 = arith.cmpi eq, %arg1, %c0_i32_17 : i32
    %22 = arith.andi %20, %21 : i1
    %23 = arith.extui %22 : i1 to i32
    %c0_i32_18 = arith.constant 0 : i32
    %24 = arith.cmpi ne, %23, %c0_i32_18 : i32
    scf.if %24 {
      %cst_22 = arith.constant 0.000000e+00 : f32
      %31 = vector.broadcast %cst_22 : f32 to vector<8x1xf32>
      %c0_23 = arith.constant 0 : index
      %c0_24 = arith.constant 0 : index
      %32 = vector.load %arg7[%c0_23, %c0_24] : memref<8x1xf32, #tpu.memory_space<vmem>>, vector<8x1xf32>
      tpu.vector_store %arg7[%c0_23, %c0_24], %31 {strides = array<i32>} : memref<8x1xf32, #tpu.memory_space<vmem>>, vector<8x1xf32>,
      %cst_25 = arith.constant 0.000000e+00 : f32
      %33 = vector.broadcast %cst_25 : f32 to vector<8x1xf32>
      %c0_26 = arith.constant 0 : index
      %c0_27 = arith.constant 0 : index
      %34 = vector.load %arg8[%c0_26, %c0_27] : memref<8x1xf32, #tpu.memory_space<vmem>>, vector<8x1xf32>
      tpu.vector_store %arg8[%c0_26, %c0_27], %33 {strides = array<i32>} : memref<8x1xf32, #tpu.memory_space<vmem>>, vector<8x1xf32>,
    } else {
    }
    %c0_i32_19 = arith.constant 0 : i32
    %25 = arith.cmpi eq, %arg0, %c0_i32_19 : i32
    %26 = arith.extui %25 : i1 to i32
    %c0_i32_20 = arith.constant 0 : i32
    %27 = arith.cmpi ne, %26, %c0_i32_20 : i32
    scf.if %27 {
      %c0_22 = arith.constant 0 : index
      %c0_23 = arith.constant 0 : index
      %31 = vector.load %arg7[%c0_22, %c0_23] : memref<8x1xf32, #tpu.memory_space<vmem>>, vector<8x1xf32>
      %cst_24 = arith.constant dense<0.000000e+00> : vector<8xf32>
      %32 = vector.multi_reduction <add>, %19, %cst_24 [1] : vector<8x8xf32> to vector<8xf32>
      %33 = vector.shape_cast %32 : vector<8xf32> to vector<8x1xf32>
      %34 = arith.addf %31, %33 : vector<8x1xf32>
      %c0_25 = arith.constant 0 : index
      %c0_26 = arith.constant 0 : index
      %35 = vector.load %arg7[%c0_25, %c0_26] : memref<8x1xf32, #tpu.memory_space<vmem>>, vector<8x1xf32>
      tpu.vector_store %arg7[%c0_25, %c0_26], %34 {strides = array<i32>} : memref<8x1xf32, #tpu.memory_space<vmem>>, vector<8x1xf32>,
      %c0_27 = arith.constant 0 : index
      %c0_28 = arith.constant 0 : index
      %36 = vector.load %arg8[%c0_27, %c0_28] : memref<8x1xf32, #tpu.memory_space<vmem>>, vector<8x1xf32>
      %37 = arith.mulf %19, %19 : vector<8x8xf32>
      %cst_29 = arith.constant dense<0.000000e+00> : vector<8xf32>
      %38 = vector.multi_reduction <add>, %37, %cst_29 [1] : vector<8x8xf32> to vector<8xf32>
      %39 = vector.shape_cast %38 : vector<8xf32> to vector<8x1xf32>
      %40 = arith.addf %36, %39 : vector<8x1xf32>
      %c0_30 = arith.constant 0 : index
      %c0_31 = arith.constant 0 : index
      %41 = vector.load %arg8[%c0_30, %c0_31] : memref<8x1xf32, #tpu.memory_space<vmem>>, vector<8x1xf32>
      tpu.vector_store %arg8[%c0_30, %c0_31], %40 {strides = array<i32>} : memref<8x1xf32, #tpu.memory_space<vmem>>, vector<8x1xf32>,
    } else {
    }
    %c1_i32 = arith.constant 1 : i32
    %28 = arith.cmpi eq, %arg0, %c1_i32 : i32
    %29 = arith.extui %28 : i1 to i32
    %c0_i32_21 = arith.constant 0 : i32
    %30 = arith.cmpi ne, %29, %c0_i32_21 : i32
    scf.if %30 {
      %c0_22 = arith.constant 0 : index
      %c0_23 = arith.constant 0 : index
      %31 = vector.load %arg7[%c0_22, %c0_23] : memref<8x1xf32, #tpu.memory_space<vmem>>, vector<8x1xf32>
      %cst_24 = arith.constant 6.250000e-02 : f32
      %32 = vector.broadcast %cst_24 : f32 to vector<8x1xf32>
      %33 = arith.mulf %31, %32 : vector<8x1xf32>
      %c0_25 = arith.constant 0 : index
      %c0_26 = arith.constant 0 : index
      %34 = vector.load %arg8[%c0_25, %c0_26] : memref<8x1xf32, #tpu.memory_space<vmem>>, vector<8x1xf32>
      %cst_27 = arith.constant 6.250000e-02 : f32
      %35 = vector.broadcast %cst_27 : f32 to vector<8x1xf32>
      %36 = arith.mulf %34, %35 : vector<8x1xf32>
      %37 = arith.mulf %33, %33 : vector<8x1xf32>
      %38 = arith.subf %36, %37 : vector<8x1xf32>
      %c0_28 = arith.constant 0 : index
      %c0_29 = arith.constant 0 : index
      %39 = vector.load %arg4[%c0_28, %c0_29] : memref<8x1xf32, #tpu.memory_space<vmem>>, vector<8x1xf32>
      %cst_30 = arith.constant 9.99999974E-6 : f32
      %40 = vector.broadcast %cst_30 : f32 to vector<8x1xf32>
      %41 = arith.addf %38, %40 : vector<8x1xf32>
      %42 = math.rsqrt %41 : vector<8x1xf32>
      %43 = arith.mulf %39, %42 : vector<8x1xf32>
      %c0_31 = arith.constant 0 : index
      %c0_32 = arith.constant 0 : index
      %44 = vector.load %arg5[%c0_31, %c0_32] : memref<8x1xf32, #tpu.memory_space<vmem>>, vector<8x1xf32>
      %45 = arith.mulf %33, %43 : vector<8x1xf32>
      %46 = arith.subf %44, %45 : vector<8x1xf32>
      %47 = vector.broadcast %43 : vector<8x1xf32> to vector<8x8xf32>
      %48 = arith.mulf %19, %47 : vector<8x8xf32>
      %49 = vector.broadcast %46 : vector<8x1xf32> to vector<8x8xf32>
      %50 = arith.addf %48, %49 : vector<8x8xf32>
      %cst_33 = arith.constant 0.000000e+00 : f32
      %51 = vector.broadcast %cst_33 : f32 to vector<8x8xf32>
      %52 = arith.maximumf %50, %51 : vector<8x8xf32>
      %c0_34 = arith.constant 0 : index
      %c0_35 = arith.constant 0 : index
      %c0_36 = arith.constant 0 : index
      %53 = vector.load %arg6[%c0_34, %c0_35, %c0_36] : memref<1x8x8xf32, #tpu.memory_space<vmem>>, vector<1x8x8xf32>
      %54 = vector.shape_cast %53 : vector<1x8x8xf32> to vector<8x8xf32>
      %55 = vector.shape_cast %52 : vector<8x8xf32> to vector<1x8x8xf32>
      tpu.vector_store %arg6[%c0_34, %c0_35, %c0_36], %55 {strides = array<i32>} : memref<1x8x8xf32, #tpu.memory_space<vmem>>, vector<1x8x8xf32>,
    } else {
    }
    return
  }
  func.func @transform_0(%arg0: i32, %arg1: i32) -> (i32, i32, i32, i32) {
    %c0_i32 = arith.constant 0 : i32
    %c0_i32_0 = arith.constant 0 : i32
    %c0_i32_1 = arith.constant 0 : i32
    %c0_i32_2 = arith.constant 0 : i32
    return %arg1, %c0_i32, %c0_i32_0, %c0_i32_1 : i32, i32, i32, i32
  }
  func.func @transform_1(%arg0: i32, %arg1: i32) -> (i32, i32, i32) {
    %c0_i32 = arith.constant 0 : i32
    %c0_i32_0 = arith.constant 0 : i32
    %c0_i32_1 = arith.constant 0 : i32
    %c0_i32_2 = arith.constant 0 : i32
    return %c0_i32, %c0_i32_0, %c0_i32_1 : i32, i32, i32
  }
  func.func @transform_2(%arg0: i32, %arg1: i32) -> (i32, i32) {
    %c0_i32 = arith.constant 0 : i32
    %c0_i32_0 = arith.constant 0 : i32
    %c0_i32_1 = arith.constant 0 : i32
    return %c0_i32, %c0_i32_0 : i32, i32
  }
  func.func @transform_3(%arg0: i32, %arg1: i32) -> (i32, i32) {
    %c0_i32 = arith.constant 0 : i32
    %c0_i32_0 = arith.constant 0 : i32
    %c0_i32_1 = arith.constant 0 : i32
    return %c0_i32, %c0_i32_0 : i32, i32
  }
  func.func @transform_4(%arg0: i32, %arg1: i32) -> (i32, i32, i32) {
    %0 = arith.muli %arg0, %arg1 : i32
    %c0_i32 = arith.constant 0 : i32
    %c0_i32_0 = arith.constant 0 : i32
    %c0_i32_1 = arith.constant 0 : i32
    return %0, %c0_i32, %c0_i32_0 : i32, i32, i32
  }
}

</mosaic_0001>

<llo_original>
// kernel: tpu_custom_call.1
$region0: #{tpu_custom_call.1}
  #allocation0 [shape = 'u32[]', space=smem, size = 0x4, offset = 0x4, fixed_abs, tag = 'smem constant byte address 0x4 - core index']
  #allocation1 [shape = 'u32[72,128]{1,0:T(1,128)}', space=vmem, size = 0x9000, scoped, tag = 'internal scratch']
  #allocation2 [shape = 'f32[8,1]{1,0:T(8,128)}', space=vmem, size = 0x1000, scoped, tag = 'scratch operand']
  #allocation3 [shape = 'f32[8,1]{1,0:T(8,128)}', space=vmem, size = 0x1000, scoped, tag = 'scratch operand']
  %s0 = inlined_call_operand.vmem [shape: bf16[2,2,4,9], index: 0, kind: input, shape index: {}]
  %s1 = inlined_call_operand.vmem [shape: bf16[3,8,4], index: 1, kind: input, shape index: {}]
  %s2 = inlined_call_operand.vmem [shape: f32[8,1], index: 2, kind: input, shape index: {}]
  %s3 = inlined_call_operand.vmem [shape: f32[8,1], index: 3, kind: input, shape index: {}]
  %s4 = inlined_call_operand.hbm [shape: f32[2,8,8], index: 4, kind: output, shape index: {}]
  %s5 = sld [smem:[#allocation0]]
  $region61: #{tpu_custom_call.1} parent=0
    _
  %s7 = ssub.s32 1, %s5
  %s8 = scalar_select 0, %s7, %s5
  $region1: #{tpu_custom_call.1} parent=0
    #allocation4 [shape = 'u8[8192]{0}', space=vmem, size = 0x2000, scoped, tag = 'output window, operand 0']
    #allocation5 [shape = 's32[2]{0}', space=sflag, size = 0x8, scoped, tag = 'scoped memory for tpu_custom_call.1']
    %9 = vsyncpa [#allocation5], 0
    %s10 = scalar_lea.sflag [#allocation5], 1
    %11 = vsyncpa %s10, 0
    loop: start=0, step=1, limit=6
    $region2: #{tpu_custom_call.1} parent=1 // loop_pre_header
      _
    $region3: #{tpu_custom_call.1} parent=1 // loop_header
      %s13 = sphi 0, %s17
      %p14 = scmp.ge.s32.totalorder %s13, 6
      %s20 = sphi 0, %s32
      %s21 = sphi 0, %s28
      %s22 = sphi 0, %s20
      %s23 = sphi 0, %s21
      %s24 = sphi 0, %s22
      %s25 = sphi 0, %s23
      %s35 = sphi 0, %s37
      %s38 = sphi 0, %s35
      %s39 = sphi 0, %s38
      %s55 = sphi 0, %s39
      %s59 = sphi 0, %s59
      %s61 = sphi 0, %s59
      %s62 = sphi 0, %s61
      %s76 = sphi 0, %s62
      %s80 = sphi 0, %s80
      %s82 = sphi 0, %s80
      %s83 = sphi 0, %s82
      %s97 = sphi 0, %s83
      %s101 = sphi 0, %s101
      %s103 = sphi 0, %s101
      %s104 = sphi 0, %s103
      %s118 = sphi 0, %s104
      %s126 = sphi 0, %s128
      %s129 = sphi 0, %s126
      %s130 = sphi 0, %s129
      %s146 = sphi 0, %s130
    $region4: #{tpu_custom_call.1} parent=1 // loop_header_branch
      %16 = sbr.rel (%p14) target = $region8
    $region5: #{tpu_custom_call.1} parent=1 // loop_body
      %s18 = ssub.s32 %s13, 1
      %s19 = ssub.s32 %s13, 2
      %s26 = sadd.s32 1, %s21
      %p27 = scmp.ge.s32.totalorder %s26, 2
      %s28 = scalar_select %p27, 0, %s26
      %s29 = sadd.s32 1, %s20
      %s30 = scalar_select %p27, %s29, %s20
      %p31 = scmp.ge.s32.totalorder %s30, 2
      %s32 = scalar_select %p31, 0, %s30
      %s33 = ssub.s32 %s21, %s28
      %p34 = scmp.eq.s32.totalorder %s33, 0
      %s36 = sadd.s32 %s35, 1
      %s37 = scalar_select %p34, %s35, %s36
      %p40 = pneg %p34
      %p41 = scmp.eq.s32.totalorder %s13, 3
      %p42 = por %p40, %p41
      %p43 = scmp.ne.s32.totalorder %s35, %s38
      %p44 = scmp.eq.s32.totalorder %s13, 0
      %p45 = por %p43, %p44
      %p46 = scmp.ne.s32.totalorder %s35, %s38
      %p47 = scmp.eq.s32.totalorder %s18, 3
      %p48 = por %p46, %p47
      %p49 = scmp.ne.s32.totalorder %s38, %s39
      %p50 = scmp.eq.s32.totalorder %s18, 0
      %p51 = por %p49, %p50
      %p52 = scmp.ne.s32.totalorder %s38, %s39
      %p53 = scmp.eq.s32.totalorder %s19, 3
      %p54 = por %p52, %p53
      %p56 = scmp.ne.s32.totalorder %s39, %s55
      %p57 = scmp.eq.s32.totalorder %s19, 0
      %p58 = por %p56, %p57
      %s60 = sadd.s32 %s59, 1
      %p63 = scmp.eq.s32.totalorder %s13, 3
      %p64 = scmp.ne.s32.totalorder %s59, %s61
      %p65 = scmp.eq.s32.totalorder %s13, 0
      %p66 = por %p64, %p65
      %p67 = scmp.ne.s32.totalorder %s59, %s61
      %p68 = scmp.eq.s32.totalorder %s18, 3
      %p69 = por %p67, %p68
      %p70 = scmp.ne.s32.totalorder %s61, %s62
      %p71 = scmp.eq.s32.totalorder %s18, 0
      %p72 = por %p70, %p71
      %p73 = scmp.ne.s32.totalorder %s61, %s62
      %p74 = scmp.eq.s32.totalorder %s19, 3
      %p75 = por %p73, %p74
      %p77 = scmp.ne.s32.totalorder %s62, %s76
      %p78 = scmp.eq.s32.totalorder %s19, 0
      %p79 = por %p77, %p78
      %s81 = sadd.s32 %s80, 1
      %p84 = scmp.eq.s32.totalorder %s13, 3
      %p85 = scmp.ne.s32.totalorder %s80, %s82
      %p86 = scmp.eq.s32.totalorder %s13, 0
      %p87 = por %p85, %p86
      %p88 = scmp.ne.s32.totalorder %s80, %s82
      %p89 = scmp.eq.s32.totalorder %s18, 3
      %p90 = por %p88, %p89
      %p91 = scmp.ne.s32.totalorder %s82, %s83
      %p92 = scmp.eq.s32.totalorder %s18, 0
      %p93 = por %p91, %p92
      %p94 = scmp.ne.s32.totalorder %s82, %s83
      %p95 = scmp.eq.s32.totalorder %s19, 3
      %p96 = por %p94, %p95
      %p98 = scmp.ne.s32.totalorder %s83, %s97
      %p99 = scmp.eq.s32.totalorder %s19, 0
      %p100 = por %p98, %p99
      %s102 = sadd.s32 %s101, 1
      %p105 = scmp.eq.s32.totalorder %s13, 3
      %p106 = scmp.ne.s32.totalorder %s101, %s103
      %p107 = scmp.eq.s32.totalorder %s13, 0
      %p108 = por %p106, %p107
      %p109 = scmp.ne.s32.totalorder %s101, %s103
      %p110 = scmp.eq.s32.totalorder %s18, 3
      %p111 = por %p109, %p110
      %p112 = scmp.ne.s32.totalorder %s103, %s104
      %p113 = scmp.eq.s32.totalorder %s18, 0
      %p114 = por %p112, %p113
      %p115 = scmp.ne.s32.totalorder %s103, %s104
      %p116 = scmp.eq.s32.totalorder %s19, 3
      %p117 = por %p115, %p116
      %p119 = scmp.ne.s32.totalorder %s104, %s118
      %p120 = scmp.eq.s32.totalorder %s19, 0
      %p121 = por %p119, %p120
      %s122 = smul.u32 %s20, %s21
      %s123 = smul.u32 %s32, %s28
      %s124 = ssub.s32 %s122, %s123
      %p125 = scmp.eq.s32.totalorder %s124, 0
      %s127 = sadd.s32 %s126, 1
      %s128 = scalar_select %p125, %s126, %s127
      %p131 = pneg %p125
      %p132 = scmp.eq.s32.totalorder %s13, 3
      %p133 = por %p131, %p132
      %p134 = scmp.ne.s32.totalorder %s126, %s129
      %p135 = scmp.eq.s32.totalorder %s13, 0
      %p136 = por %p134, %p135
      %p137 = scmp.ne.s32.totalorder %s126, %s129
      %p138 = scmp.eq.s32.totalorder %s18, 3
      %p139 = por %p137, %p138
      %p140 = scmp.ne.s32.totalorder %s129, %s130
      %p141 = scmp.eq.s32.totalorder %s18, 0
      %p142 = por %p140, %p141
      %p143 = scmp.ne.s32.totalorder %s129, %s130
      %p144 = scmp.eq.s32.totalorder %s19, 3
      %p145 = por %p143, %p144
      %p147 = scmp.ne.s32.totalorder %s130, %s146
      %p148 = scmp.eq.s32.totalorder %s19, 0
      %p149 = por %p147, %p148
      %p150 = scmp.le.s32.totalorder 1, %s13
      %p151 = scmp.lt.s32.totalorder %s13, 5
      %p152 = pnand %p150, %p151
      %p153 = pneg %p152
      // Predicated region
      $region9: #{tpu_custom_call.1} parent=5 // pred_check
        _
      $region10: #{tpu_custom_call.1} parent=5 // pred_check_branch
        %155 = sbr.rel (%p152) target = $region12
      $region11: #{tpu_custom_call.1} parent=5 // pred_region
        %s156 = ssub.s32 %s13, 1
        // Predicated region
        $region13: #{tpu_custom_call.1} parent=11 // pred_check
          %p157 = pneg %p72
        $region14: #{tpu_custom_call.1} parent=11 // pred_check_branch
          %159 = sbr.rel (%p157) target = $region16
        $region15: #{tpu_custom_call.1} parent=11 // pred_region
          _
        $region16: #{tpu_custom_call.1} parent=11 // pred_fallthru
          _
        // Predicated region
        $region17: #{tpu_custom_call.1} parent=11 // pred_check
          %p160 = pneg %p93
        $region18: #{tpu_custom_call.1} parent=11 // pred_check_branch
          %162 = sbr.rel (%p160) target = $region20
        $region19: #{tpu_custom_call.1} parent=11 // pred_region
          _
        $region20: #{tpu_custom_call.1} parent=11 // pred_fallthru
          _
        // Predicated region
        $region21: #{tpu_custom_call.1} parent=11 // pred_check
          %p163 = pneg %p114
        $region22: #{tpu_custom_call.1} parent=11 // pred_check_branch
          %165 = sbr.rel (%p163) target = $region24
        $region23: #{tpu_custom_call.1} parent=11 // pred_region
          _
        $region24: #{tpu_custom_call.1} parent=11 // pred_fallthru
          _
      $region12: #{tpu_custom_call.1} parent=5 // pred_fallthru
        _
      %p166 = scmp.lt.s32.totalorder %s13, 4
      // Predicated region
      $region25: #{tpu_custom_call.1} parent=5 // pred_check
        %p167 = pneg %p166
      $region26: #{tpu_custom_call.1} parent=5 // pred_check_branch
        %169 = sbr.rel (%p167) target = $region28
      $region27: #{tpu_custom_call.1} parent=5 // pred_region
        // Predicated region
        $region29: #{tpu_custom_call.1} parent=27 // pred_check
          %p170 = pneg %p45
        $region30: #{tpu_custom_call.1} parent=27 // pred_check_branch
          %172 = sbr.rel (%p170) target = $region32
        $region31: #{tpu_custom_call.1} parent=27 // pred_region
          %p173 = scmp.lt.s32.totalorder %s21, 1
          %s174 = scalar_select %p173, %s21, 1
          %s175 = smul.addr %s174, 2
          %s176 = smul.addr %s175, 2
          %s177 = scalar_lea.vmem %s0, %s176
        $region32: #{tpu_custom_call.1} parent=27 // pred_fallthru
          _
      $region28: #{tpu_custom_call.1} parent=5 // pred_fallthru
        _
      %p178 = scmp.le.s32.totalorder 1, %s13
      %p179 = scmp.lt.s32.totalorder %s13, 5
      %p180 = pnand %p178, %p179
      %p181 = pneg %p180
      // Predicated region
      $region33: #{tpu_custom_call.1} parent=5 // pred_check
        _
      $region34: #{tpu_custom_call.1} parent=5 // pred_check_branch
        %183 = sbr.rel (%p180) target = $region36
      $region35: #{tpu_custom_call.1} parent=5 // pred_region
        %s184 = ssub.s32 %s13, 1
        %p185 = scmp.lt.s32.totalorder %s23, 1
        %s186 = scalar_select %p185, %s23, 1
        %s187 = smul.addr %s186, 2
        %s188 = smul.addr %s187, 2
        %s189 = scalar_lea.vmem %s0, %s188
        %p190 = pneg %p51
        %p191 = pneg %p48
        %p192 = pneg %p72
        %p193 = pneg %p69
        %p194 = pneg %p93
        %p195 = pneg %p90
        %p196 = pneg %p114
        %p197 = pneg %p111
        %p198 = pneg %p142
        %p199 = pneg %p139
        %s200 = sand.u32 %s129, 1
        %s201 = scalar_lea.sflag [#allocation5], %s200
        %s202 = sand.u32 %s129, 1
        %s203 = smul.addr %s202, 8
        %s204 = scalar_lea.vmem [#allocation4], %s203
        %p205 = scmp.lt.s32.totalorder %s23, 1
        %s206 = scalar_select %p205, %s23, 1
        %s207 = smul.addr %s206, 2
        %s208 = smul.addr %s207, 2
        %s209 = scalar_lea.vmem %s0, %s208
        %s210 = smul.u32 %s22, %s23
        %v212 = vld [vmem:[%s209] sm:$0x3]
        %s213 = scalar_lea.vmem %s209, 2
        %v214 = vld [vmem:[%s213] sm:$0x3]
        %v215 = vld [vmem:[%s1] sm:$0xf]
        %s216 = scalar_lea.vmem %s1, 4
        %v217 = vld [vmem:[%s216] sm:$0xf]
        %vm218 = vcmask 31744
        %v220 = vsel %vm218, %v217, 0
        %vm222 = vcmask 1041408
        %v224 = vsel %vm222, %v214, 0
        %226 = vmatpush.bf16.msra.mxu0 0
        %227 = vmatpush.bf16.msra.mxu0 0
        %228 = vmatpush.bf16.msra.mxu0 0
        %229 = vmatpush.bf16.msra.mxu0 0
        %230 = vmatpush.bf16.msra.mxu0 0
        %231 = vmatpush.bf16.msra.mxu0 0
        %232 = vmatpush.bf16.msra.mxu0 0
        %233 = vmatpush.bf16.msra.mxu0 %v224
        %234 = vmatmul.bf16.gmra.mxu0 %v220
        %v235 = vpop.f32.mrf.mxu0
        %v236 = vadd.f32 0.0, %v235
        %v237 = vpop.f32.mrf.mxu0
        %238 = vdwg.mxu0
        %v240 = vsel %vm218, %v215, 0
        %v243 = vsel %vm222, %v212, 0
        %245 = vmatpush.bf16.msra.mxu0 0
        %246 = vmatpush.bf16.msra.mxu0 0
        %247 = vmatpush.bf16.msra.mxu0 0
        %248 = vmatpush.bf16.msra.mxu0 0
        %249 = vmatpush.bf16.msra.mxu0 0
        %250 = vmatpush.bf16.msra.mxu0 0
        %251 = vmatpush.bf16.msra.mxu0 0
        %252 = vmatpush.bf16.msra.mxu0 %v243
        %253 = vmatmul.bf16.gmra.mxu0 %v240
        %v254 = vpop.f32.mrf.mxu0
        %v255 = vadd.f32 %v236, %v254
        %v256 = vpop.f32.mrf.mxu0
        %257 = vdwg.mxu0
        %s258 = scalar_lea.vmem %s1, 8
        %v259 = vld [vmem:[%s258] sm:$0xf]
        %260 = vst [vmem:[#allocation1] ss:$4 sm:$0xff] %v212
        %v261 = vld.sshfl [vmem:[#allocation1] sm:$0xff pattern:$0x73625140]
        %263 = vrot.lane.b32.xlu0 %v261, 127
        %v264 = vpop.permute.xlu0 %263
        %v266 = vsel %vm218, %v259, 0
        %v269 = vsel %vm222, %v264, 0
        %271 = vmatpush.bf16.msra.mxu0 0
        %272 = vmatpush.bf16.msra.mxu0 0
        %273 = vmatpush.bf16.msra.mxu0 0
        %274 = vmatpush.bf16.msra.mxu0 0
        %275 = vmatpush.bf16.msra.mxu0 0
        %276 = vmatpush.bf16.msra.mxu0 0
        %277 = vmatpush.bf16.msra.mxu0 0
        %278 = vmatpush.bf16.msra.mxu0 %v269
        %279 = vmatmul.bf16.gmra.mxu0 %v266
        %v280 = vpop.f32.mrf.mxu0
        %v281 = vadd.f32 0.0, %v280
        %v282 = vpop.f32.mrf.mxu0
        %283 = vdwg.mxu0
        %v284 = vadd.f32 %v255, %v281
        %p285 = scmp.eq.s32.totalorder %s22, 0
        %p286 = scmp.eq.s32.totalorder %s23, 0
        %p287 = pnand %p285, %p286
        %p288 = pneg %p287
        // Predicated region
        $region37: #{tpu_custom_call.1} parent=35 // pred_check
          _
        $region38: #{tpu_custom_call.1} parent=35 // pred_check_branch
          %290 = sbr.rel (%p287) target = $region40
        $region39: #{tpu_custom_call.1} parent=35 // pred_region
          %vm291 = vcmask 7168
          %292 = vst.msk [vmem:[#allocation2] sm:$0xff] %vm291, 0.0
          %293 = vst.msk [vmem:[#allocation3] sm:$0xff] %vm291, 0.0
        $region40: #{tpu_custom_call.1} parent=35 // pred_fallthru
          _
        // Predicated region
        $region41: #{tpu_custom_call.1} parent=35 // pred_check
          %p294 = pneg %p285
        $region42: #{tpu_custom_call.1} parent=35 // pred_check_branch
          %296 = sbr.rel (%p294) target = $region44
        $region43: #{tpu_custom_call.1} parent=35 // pred_region
          %v297 = vld [vmem:[#allocation2] sm:$0xff]
          %vm298 = vcmask 64512
          %v299 = vsel %vm298, %v284, 0.0
          %300 = vadd.xlane.f32.xlu0 %v299
          %v301 = vpop.xlane.xlu0 %300
          %v302 = vadd.f32 %v297, %v301
          %vm303 = vcmask 7168
          %304 = vst.msk [vmem:[#allocation2] sm:$0xff] %vm303, %v302
          %v305 = vld [vmem:[#allocation3] sm:$0xff]
          %v306 = vmul.f32 %v284, %v284
          %v307 = vsel %vm298, %v306, 0.0
          %308 = vadd.xlane.f32.xlu0 %v307
          %v309 = vpop.xlane.xlu0 %308
          %v310 = vadd.f32 %v305, %v309
          %311 = vst.msk [vmem:[#allocation3] sm:$0xff] %vm303, %v310
        $region44: #{tpu_custom_call.1} parent=35 // pred_fallthru
          _
        %p312 = scmp.eq.s32.totalorder %s22, 1
        // Predicated region
        $region45: #{tpu_custom_call.1} parent=35 // pred_check
          %p313 = pneg %p312
        $region46: #{tpu_custom_call.1} parent=35 // pred_check_branch
          %315 = sbr.rel (%p313) target = $region48
        $region47: #{tpu_custom_call.1} parent=35 // pred_region
          %v316 = vld [vmem:[#allocation2] sm:$0xff]
          %v317 = vmul.f32 %v316, 0.0625
          %v318 = vld [vmem:[#allocation3] sm:$0xff]
          %v319 = vmul.f32 %v318, 0.0625
          %v320 = vmul.f32 %v317, %v317
          %v321 = vsub.f32 %v319, %v320
          %v322 = vld [vmem:[%s2] sm:$0xff]
          %v323 = vadd.f32 %v321, 1e-05
          %v324 = vrsqrt.pop %v323
          %v325 = vmul.f32 %v324, %v323
          %v326 = vmul.f32 %v325, %v324
          %v327 = vmul.f32 0.5, %v326
          %v328 = vsub.f32 1.5, %v327
          %v329 = vmul.f32 %v324, %v328
          %vm330 = vweird.f32 %v323
          %vm331 = vweird.f32 %v324
          %vm332 = vmor %vm330, %vm331
          %v333 = vsel %vm332, %v324, %v329
          %v334 = vmul.f32 %v322, %v333
          %v335 = vld [vmem:[%s3] sm:$0xff]
          %v336 = vmul.f32 %v317, %v334
          %v337 = vsub.f32 %v335, %v336
          %339 = vset.pattern.permute.xlu0 0
          %340 = vperm.xlu0 %339, %v334
          %v341 = vpop.permute.xlu0 %340
          %v343 = vmul.f32 %v284, %v341
          %345 = vset.pattern.permute.xlu0 0
          %346 = vperm.xlu0 %345, %v337
          %v347 = vpop.permute.xlu0 %346
          %v349 = vadd.f32 %v343, %v347
          %v350 = vmax.f32 %v349, 0.0
          %vm351 = vcmask 64512
          %352 = vst.msk [vmem:[%s204] sm:$0xff] %vm351, %v350
        $region48: #{tpu_custom_call.1} parent=35 // pred_fallthru
          _
        %s353 = sand.u32 %s129, 1
        %s354 = scalar_lea.sflag [#allocation5], %s353
        %s355 = sand.u32 %s129, 1
        %s356 = smul.addr %s355, 8
        %s357 = scalar_lea.vmem [#allocation4], %s356
        // Predicated region
        $region49: #{tpu_custom_call.1} parent=35 // pred_check
          %p358 = pneg %p139
        $region50: #{tpu_custom_call.1} parent=35 // pred_check_branch
          %360 = sbr.rel (%p358) target = $region52
        $region51: #{tpu_custom_call.1} parent=35 // pred_region
          %s361 = smul.u32 %s22, %s23
          %363 = vsyncadd %s354, 0
          %s364 = smul.addr %s361, 8
          %s365 = scalar_lea.hbm %s4, %s364
          %s367 = sshll.u32 %s357, 4
          %s368 = int_to_ptr.vmem [resolvable:$true] %s367
          %s369 = sshll.u32 %s365, 4
          %s370 = int_to_ptr.hbm [resolvable:$true] %s369
          %372 = dma.vmem_to_hbm [thread:$0]  %s368, 128, %s370, %s354
        $region52: #{tpu_custom_call.1} parent=35 // pred_fallthru
          _
      $region36: #{tpu_custom_call.1} parent=5 // pred_fallthru
        _
      %p373 = scmp.le.s32.totalorder 2, %s13
      // Predicated region
      $region53: #{tpu_custom_call.1} parent=5 // pred_check
        %p374 = pneg %p373
      $region54: #{tpu_custom_call.1} parent=5 // pred_check_branch
        %376 = sbr.rel (%p374) target = $region56
      $region55: #{tpu_custom_call.1} parent=5 // pred_region
        %s377 = ssub.s32 %s13, 2
        // Predicated region
        $region57: #{tpu_custom_call.1} parent=55 // pred_check
          %p378 = pneg %p145
        $region58: #{tpu_custom_call.1} parent=55 // pred_check_branch
          %380 = sbr.rel (%p378) target = $region60
        $region59: #{tpu_custom_call.1} parent=55 // pred_region
          %s381 = sand.u32 %s130, 1
          %s382 = scalar_lea.sflag [#allocation5], %s381
          %s383 = sand.u32 %s130, 1
          %s384 = smul.addr %s383, 8
          %s385 = scalar_lea.vmem [#allocation4], %s384
          %387 = dma.done %s382, 128
        $region60: #{tpu_custom_call.1} parent=55 // pred_fallthru
          _
      $region56: #{tpu_custom_call.1} parent=5 // pred_fallthru
        _
    $region6: #{tpu_custom_call.1} parent=1 // loop_footer
      %s17 = sadd.s32 1, %s13
    $region7: #{tpu_custom_call.1} parent=1 // loop_footer_branch
      %12 = sbr.rel target = $region3
    $region8: #{tpu_custom_call.1} parent=1 // loop_exit
      _
    %388 = vsyncpa [#allocation5], 1
    %s389 = scalar_lea.sflag [#allocation5], 1
    %390 = vsyncpa %s389, 1

</llo_original>
